<compile_context>
chip_gen: v7x
topology: tpu7x:2x2x1
jax: 0.10.0
libtpu: 0.0.40
codegen_flags: <defaults>
</compile_context>

<pallas_src>
import functools

import jax
import jax.numpy as jnp
from jax.experimental import pallas as pl
from jax.experimental.pallas import tpu as pltpu


_LANE = 128          # lane width (last dim)
_SUBLANE_BF16 = 16   # bf16 packs 16 rows per vreg sublane group


def _round_up(x, m):
    return ((x + m - 1) // m) * m


def _vmem_budget_bytes():
    """Conservative single-block VMEM budget, generation-aware when queryable."""
    try:
        cap = pltpu.get_tpu_info().vmem_capacity_bytes   # 128 MiB v5e/v6e, 64 MiB v7x
    except Exception:
        cap = 64 << 20                                   # assume v7x worst case
    return cap // 4                                      # leave headroom for compiler scratch


def _fused_mlp_kernel(*refs, n_layers):
    """refs = (x, w1, b1, ..., wL, bL, out). Full MLP on VMEM-resident single blocks."""
    x_ref = refs[0]
    out_ref = refs[-1]
    # Input arrives f32; cast to bf16 in-kernel (saves a separate XLA convert dispatch;
    # the extra f32 input DMA bytes are negligible vs dispatch latency at these sizes).
    h = x_ref[...].astype(jnp.bfloat16)
    for i in range(n_layers):
        w_ref = refs[1 + 2 * i]
        b_ref = refs[2 + 2 * i]
        y = jnp.dot(h, w_ref[...], preferred_element_type=jnp.float32)  # MXU, f32 accumulate
        y = y + b_ref[...]                                              # f32 bias epilogue
        if i < n_layers - 1:
            # ReLU in f32 (v5e VPU has no bf16 path), then back to bf16 for next MXU pass.
            # Dropout(0.2): identity at inference time (no-op).
            y = jnp.maximum(y, 0.0).astype(jnp.bfloat16)
        h = y
    out_ref[...] = h.astype(out_ref.dtype)


def prep_mlp_params(params):
    """One-time parameter prep: pad to lane multiples, weights -> bf16, biases -> f32 [1, Np].

    Done once at init (NOT per forward call) so the hot path never re-materializes the
    padded/converted weights or pays their inflated HBM traffic.
    """
    cur_kp = _round_up(params[0][0].shape[0], _LANE)
    prepped = []
    for (w, b) in params:
        k, n = w.shape
        np_ = _round_up(n, _LANE)
        # Zero-padded rows/cols and biases give exactly-zero padded lanes through ReLU.
        w_p = jnp.pad(w, ((0, cur_kp - k), (0, np_ - n))).astype(jnp.bfloat16)
        b_p = jnp.pad(b, (0, np_ - n)).astype(jnp.float32).reshape(1, np_)
        prepped.append((w_p, b_p))
        cur_kp = np_
    return prepped


def fused_mlp(x_flat, prepped_params, n_class):
    """x_flat: [B, K] f32; prepped_params: list of (w_p bf16 [Kp_i, Np_i], b_p f32 [1, Np_i])."""
    B, K = x_flat.shape
    n_layers = len(prepped_params)

    Bp = _round_up(B, _SUBLANE_BF16)          # bf16-packed rows -> fully packed vregs
    Kp = prepped_params[0][0].shape[0]
    assert K <= Kp, "flattened input wider than prepped first-layer weights"

    # Single fused pad op (under jit); padded rows/cols contribute exact zeros.
    if Bp != B or Kp != K:
        x_p = jnp.pad(x_flat, ((0, Bp - B), (0, Kp - K)))
    else:
        x_p = x_flat

    flat_inputs = [x_p]
    in_specs = [pl.BlockSpec((Bp, Kp), lambda: (0, 0))]
    flops = 0
    bytes_accessed = x_p.size * x_p.dtype.itemsize
    vmem_bytes = 2 * x_p.size * x_p.dtype.itemsize        # x2: pipeline double-buffering
    cur_kp = Kp
    for (w_p, b_p) in prepped_params:
        kp, np_ = w_p.shape
        assert kp == cur_kp, "prepped weight shapes are not chained consistently"
        flat_inputs += [w_p, b_p]
        in_specs += [
            pl.BlockSpec((kp, np_), lambda: (0, 0)),
            pl.BlockSpec((1, np_), lambda: (0, 0)),
        ]
        flops += 2 * Bp * kp * np_
        bytes_accessed += w_p.size * w_p.dtype.itemsize + b_p.size * b_p.dtype.itemsize
        vmem_bytes += 2 * (w_p.size * w_p.dtype.itemsize + b_p.size * b_p.dtype.itemsize)
        cur_kp = np_

    n_out_p = cur_kp
    bytes_accessed += Bp * n_out_p * 4                     # f32 output writeback
    vmem_bytes += 2 * Bp * n_out_p * 4

    # Guard the weight-resident single-block design against VMEM capacity (v7x: 64 MiB).
    budget = _vmem_budget_bytes()
    if vmem_bytes > budget:
        # TODO(synk): tiled fallback (K-reduction 'arbitrary' axis + f32 VMEM accumulator,
        # 'parallel' batch/N axis for v7x megacore, 256-aligned tiles on v6e/v7x).
        raise ValueError(
            f"fused_mlp single-block VMEM footprint {vmem_bytes} B exceeds budget {budget} B; "
            "needs the tiled fallback.")

    kernel = functools.partial(_fused_mlp_kernel, n_layers=n_layers)
    out_p = pl.pallas_call(
        kernel,
        out_shape=jax.ShapeDtypeStruct((Bp, n_out_p), jnp.float32),
        in_specs=in_specs,
        out_specs=pl.BlockSpec((Bp, n_out_p), lambda: (0, 0)),
        cost_estimate=pl.CostEstimate(
            flops=flops, transcendentals=0, bytes_accessed=bytes_accessed),
    )(*flat_inputs)

    # Slice padded rows/lanes back off (inside the same jit as the kernel).
    return out_p[:B, :n_class]


@functools.partial(jax.jit, static_argnames=("input_dims", "n_class"))
def mlp_forward(x, prepped_params, *, input_dims, n_class):
    """Forward pass: flatten NCHW input (== input.view(input.size(0), -1)), fused MLP kernel.

    Entire forward (pad + pallas_call + slice) is one jitted executable -> one dispatch.
    """
    B = x.shape[0]
    h = x.reshape(B, -1)
    assert h.shape[1] == input_dims, "flattened input does not match input_dims"
    return fused_mlp(h, prepped_params, n_class)


def init_mlp_params(key, input_dims, n_hiddens, n_class, dtype=jnp.float32):
    """Deterministic synthetic parameters (PyTorch-style uniform fan-in init), f32 master copy."""
    if isinstance(n_hiddens, int):
        n_hiddens = [n_hiddens]
    dims = [input_dims] + list(n_hiddens) + [n_class]
    params = []
    for i in range(len(dims) - 1):
        key, kw, kb = jax.random.split(key, 3)
        fan_in, fan_out = dims[i], dims[i + 1]
        bound = 1.0 / jnp.sqrt(fan_in)
        w = jax.random.uniform(kw, (fan_in, fan_out), dtype, -bound, bound)
        b = jax.random.uniform(kb, (fan_out,), dtype, -bound, bound)
        params.append((w, b))
    return params


if __name__ == "__main__":
    key = jax.random.PRNGKey(0)
    kx, kp = jax.random.split(key)

    # Small shapes consistent with the module: batch=2, NCHW input [2,4,16,16]
    # -> input_dims = 4*16*16 = 1024, hidden sizes [32, 32], 10 classes.
    B, C, H, W = 2, 4, 16, 16
    input_dims = C * H * W
    n_hiddens = [32, 32]
    n_class = 10

    x = jax.random.normal(kx, (B, C, H, W), dtype=jnp.float32)
    params = init_mlp_params(kp, input_dims, n_hiddens, n_class)

    # One-time parameter prep (padding + bf16 cast) -- NOT on the per-call hot path.
    prepped = prep_mlp_params(params)
    prepped = jax.block_until_ready(prepped)

    out = mlp_forward(x, prepped, input_dims=input_dims, n_class=n_class)
    out = jax.block_until_ready(out)
    assert out.shape == (B, n_class)

    # Reference 1: pure-JAX with the SAME bf16 operands / f32 accumulation (tight check).
    h_ref = x.reshape(B, -1)
    for i, (w, b) in enumerate(params):
        y = jnp.dot(h_ref.astype(jnp.bfloat16), w.astype(jnp.bfloat16),
                    preferred_element_type=jnp.float32)
        y = y + b.astype(jnp.float32)
        if i < len(params) - 1:
            y = jnp.maximum(y, 0.0)
        h_ref = y
    assert jnp.allclose(out, h_ref, atol=1e-3, rtol=1e-3), "mismatch vs bf16-matched reference"

    # Reference 2: full-f32 reference (loose check on bf16 quantization error).
    h32 = x.reshape(B, -1)
    for i, (w, b) in enumerate(params):
        h32 = h32 @ w + b
        if i < len(params) - 1:
            h32 = jnp.maximum(h32, 0.0)
    assert jnp.allclose(out, h32, atol=5e-2, rtol=5e-2), "mismatch vs f32 reference"

    print("KERNEL_OK")
</pallas_src>

<mosaic_0001>
module attributes {stable_mosaic.version = 11 : i64} {
  func.func @_fused_mlp_kernel(%arg0: memref<16x1024xf32, #tpu.memory_space<vmem>>, %arg1: memref<1024x128xbf16, #tpu.memory_space<vmem>>, %arg2: memref<1x128xf32, #tpu.memory_space<vmem>>, %arg3: memref<128x128xbf16, #tpu.memory_space<vmem>>, %arg4: memref<1x128xf32, #tpu.memory_space<vmem>>, %arg5: memref<128x128xbf16, #tpu.memory_space<vmem>>, %arg6: memref<1x128xf32, #tpu.memory_space<vmem>>, %arg7: memref<16x128xf32, #tpu.memory_space<vmem>>) attributes {dimension_semantics = [], scalar_prefetch = 0 : i64, scratch_operands = 0 : i64, tpu.core_type = #tpu.core_type<tc>} {
    %c0 = arith.constant 0 : index
    %c0_0 = arith.constant 0 : index
    %0 = vector.load %arg0[%c0, %c0_0] : memref<16x1024xf32, #tpu.memory_space<vmem>>, vector<16x1024xf32>
    %1 = arith.truncf %0 : vector<16x1024xf32> to vector<16x1024xbf16>
    %c0_1 = arith.constant 0 : index
    %c0_2 = arith.constant 0 : index
    %2 = vector.load %arg1[%c0_1, %c0_2] : memref<1024x128xbf16, #tpu.memory_space<vmem>>, vector<1024x128xbf16>
    %cst = arith.constant dense<0.000000e+00> : vector<16x128xf32>
    %3 = tpu.matmul %1, %2, %cst {dimension_numbers = #tpu.dot_dimension_numbers<[1], [0], [0], [1], [0, 0, 1, 1], [], []>} : vector<16x1024xbf16>, vector<1024x128xbf16>, vector<16x128xf32> -> vector<16x128xf32>
    %c0_3 = arith.constant 0 : index
    %c0_4 = arith.constant 0 : index
    %4 = vector.load %arg2[%c0_3, %c0_4] : memref<1x128xf32, #tpu.memory_space<vmem>>, vector<1x128xf32>
    %5 = vector.broadcast %4 : vector<1x128xf32> to vector<16x128xf32>
    %6 = arith.addf %3, %5 : vector<16x128xf32>
    %cst_5 = arith.constant 0.000000e+00 : f32
    %7 = vector.broadcast %cst_5 : f32 to vector<16x128xf32>
    %8 = arith.maximumf %6, %7 : vector<16x128xf32>
    %9 = arith.truncf %8 : vector<16x128xf32> to vector<16x128xbf16>
    %c0_6 = arith.constant 0 : index
    %c0_7 = arith.constant 0 : index
    %10 = vector.load %arg3[%c0_6, %c0_7] : memref<128x128xbf16, #tpu.memory_space<vmem>>, vector<128x128xbf16>
    %cst_8 = arith.constant dense<0.000000e+00> : vector<16x128xf32>
    %11 = tpu.matmul %9, %10, %cst_8 {dimension_numbers = #tpu.dot_dimension_numbers<[1], [0], [0], [1], [0, 0, 1, 1], [], []>} : vector<16x128xbf16>, vector<128x128xbf16>, vector<16x128xf32> -> vector<16x128xf32>
    %c0_9 = arith.constant 0 : index
    %c0_10 = arith.constant 0 : index
    %12 = vector.load %arg4[%c0_9, %c0_10] : memref<1x128xf32, #tpu.memory_space<vmem>>, vector<1x128xf32>
    %13 = vector.broadcast %12 : vector<1x128xf32> to vector<16x128xf32>
    %14 = arith.addf %11, %13 : vector<16x128xf32>
    %cst_11 = arith.constant 0.000000e+00 : f32
    %15 = vector.broadcast %cst_11 : f32 to vector<16x128xf32>
    %16 = arith.maximumf %14, %15 : vector<16x128xf32>
    %17 = arith.truncf %16 : vector<16x128xf32> to vector<16x128xbf16>
    %c0_12 = arith.constant 0 : index
    %c0_13 = arith.constant 0 : index
    %18 = vector.load %arg5[%c0_12, %c0_13] : memref<128x128xbf16, #tpu.memory_space<vmem>>, vector<128x128xbf16>
    %cst_14 = arith.constant dense<0.000000e+00> : vector<16x128xf32>
    %19 = tpu.matmul %17, %18, %cst_14 {dimension_numbers = #tpu.dot_dimension_numbers<[1], [0], [0], [1], [0, 0, 1, 1], [], []>} : vector<16x128xbf16>, vector<128x128xbf16>, vector<16x128xf32> -> vector<16x128xf32>
    %c0_15 = arith.constant 0 : index
    %c0_16 = arith.constant 0 : index
    %20 = vector.load %arg6[%c0_15, %c0_16] : memref<1x128xf32, #tpu.memory_space<vmem>>, vector<1x128xf32>
    %21 = vector.broadcast %20 : vector<1x128xf32> to vector<16x128xf32>
    %22 = arith.addf %19, %21 : vector<16x128xf32>
    %c0_17 = arith.constant 0 : index
    %c0_18 = arith.constant 0 : index
    %23 = vector.load %arg7[%c0_17, %c0_18] : memref<16x128xf32, #tpu.memory_space<vmem>>, vector<16x128xf32>
    tpu.vector_store %arg7[%c0_17, %c0_18], %22 {strides = array<i32>} : memref<16x128xf32, #tpu.memory_space<vmem>>, vector<16x128xf32>,
    return
  }
}

</mosaic_0001>

<llo_original>
// kernel: mlp_forward.1
$region0: #{mlp_forward.1}
  #allocation0 [shape = 'u32[]', space=smem, size = 0x4, offset = 0x4, fixed_abs, tag = 'smem constant byte address 0x4 - core index']
  #allocation1 [shape = 'u32[144,128]{1,0:T(1,128)}', space=vmem, size = 0x12000, scoped, tag = 'internal scratch']
  %s0 = inlined_call_operand.vmem [shape: f32[16,1024], index: 0, kind: input, shape index: {}]
  %s1 = inlined_call_operand.hbm [shape: bf16[1024,128], index: 1, kind: input, shape index: {}]
  %s2 = inlined_call_operand.vmem [shape: f32[1,128], index: 2, kind: input, shape index: {}]
  %s3 = inlined_call_operand.vmem [shape: bf16[128,128], index: 3, kind: input, shape index: {}]
  %s4 = inlined_call_operand.vmem [shape: f32[1,128], index: 4, kind: input, shape index: {}]
  %s5 = inlined_call_operand.vmem [shape: bf16[128,128], index: 5, kind: input, shape index: {}]
  %s6 = inlined_call_operand.vmem [shape: f32[1,128], index: 6, kind: input, shape index: {}]
  %s7 = inlined_call_operand.vmem [shape: f32[16,128], index: 7, kind: output, shape index: {}]
  %s8 = sld [smem:[#allocation0]]
  $region42: #{mlp_forward.1} parent=0
    _
  %s10 = ssub.s32 1, %s8
  %s11 = scalar_select 0, %s10, %s8
  $region1: #{mlp_forward.1} parent=0
    #allocation2 [shape = 'u8[262144]{0}', space=vmem, size = 0x40000, scoped, tag = 'input window, operand 1, single buffered']
    #allocation3 [shape = 's32[1]{0}', space=sflag, size = 0x4, scoped, tag = 'scoped memory for mlp_forward.1']
    %12 = vsyncpa [#allocation3], 0
    // Predicated region
    $region2: #{mlp_forward.1} parent=1 // pred_check
      _
    $region3: #{mlp_forward.1} parent=1 // pred_check_branch
      %14 = sbr.rel (0) target = $region5
    $region4: #{mlp_forward.1} parent=1 // pred_region
      _
    $region5: #{mlp_forward.1} parent=1 // pred_fallthru
      _
    // Predicated region
    $region6: #{mlp_forward.1} parent=1 // pred_check
      _
    $region7: #{mlp_forward.1} parent=1 // pred_check_branch
      %16 = sbr.rel (0) target = $region9
    $region8: #{mlp_forward.1} parent=1 // pred_region
      %s18 = ssub.s32 8192, 8192
      %19 = vsyncadd [#allocation3], %s18
      %s20 = sshll.u32 [#allocation2], 4
      %s21 = int_to_ptr.vmem [resolvable:$true] %s20
      %26 = dma.hbm_to_vmem [thread:$0]  %s1, 8192, %s21, [#allocation3], 64, 64, 4
    $region9: #{mlp_forward.1} parent=1 // pred_fallthru
      _
    // Predicated region
    $region10: #{mlp_forward.1} parent=1 // pred_check
      _
    $region11: #{mlp_forward.1} parent=1 // pred_check_branch
      %28 = sbr.rel (0) target = $region13
    $region12: #{mlp_forward.1} parent=1 // pred_region
      _
    $region13: #{mlp_forward.1} parent=1 // pred_fallthru
      _
    // Predicated region
    $region14: #{mlp_forward.1} parent=1 // pred_check
      _
    $region15: #{mlp_forward.1} parent=1 // pred_check_branch
      %30 = sbr.rel (0) target = $region17
    $region16: #{mlp_forward.1} parent=1 // pred_region
      _
    $region17: #{mlp_forward.1} parent=1 // pred_fallthru
      _
    // Predicated region
    $region18: #{mlp_forward.1} parent=1 // pred_check
      _
    $region19: #{mlp_forward.1} parent=1 // pred_check_branch
      %32 = sbr.rel (0) target = $region21
    $region20: #{mlp_forward.1} parent=1 // pred_region
      _
    $region21: #{mlp_forward.1} parent=1 // pred_fallthru
      _
    // Predicated region
    $region22: #{mlp_forward.1} parent=1 // pred_check
      _
    $region23: #{mlp_forward.1} parent=1 // pred_check_branch
      %34 = sbr.rel (0) target = $region25
    $region24: #{mlp_forward.1} parent=1 // pred_region
      _
    $region25: #{mlp_forward.1} parent=1 // pred_fallthru
      _
    // Predicated region
    $region26: #{mlp_forward.1} parent=1 // pred_check
      _
    $region27: #{mlp_forward.1} parent=1 // pred_check_branch
      %36 = sbr.rel (0) target = $region29
    $region28: #{mlp_forward.1} parent=1 // pred_region
      _
    $region29: #{mlp_forward.1} parent=1 // pred_fallthru
      _
    // Predicated region
    $region30: #{mlp_forward.1} parent=1 // pred_check
      _
    $region31: #{mlp_forward.1} parent=1 // pred_check_branch
      %38 = sbr.rel (0) target = $region33
    $region32: #{mlp_forward.1} parent=1 // pred_region
      %39 = dma.done [#allocation3], 8192
    $region33: #{mlp_forward.1} parent=1 // pred_fallthru
      _
    %v41 = vld [vmem:[%s0] sm:$0xff]
    %v42 = vld [vmem:[%s0 + $0x8] sm:$0xff]
    %v43 = vld [vmem:[%s0 + $0x10] sm:$0xff]
    %v44 = vld [vmem:[%s0 + $0x18] sm:$0xff]
    %v45 = vld [vmem:[%s0 + $0x20] sm:$0xff]
    %v46 = vld [vmem:[%s0 + $0x28] sm:$0xff]
    %v47 = vld [vmem:[%s0 + $0x30] sm:$0xff]
    %v48 = vld [vmem:[%s0 + $0x38] sm:$0xff]
    %v49 = vld [vmem:[%s0 + $0x40] sm:$0xff]
    %v50 = vld [vmem:[%s0 + $0x48] sm:$0xff]
    %v51 = vld [vmem:[%s0 + $0x50] sm:$0xff]
    %v52 = vld [vmem:[%s0 + $0x58] sm:$0xff]
    %v53 = vld [vmem:[%s0 + $0x60] sm:$0xff]
    %v54 = vld [vmem:[%s0 + $0x68] sm:$0xff]
    %v55 = vld [vmem:[%s0 + $0x70] sm:$0xff]
    %v56 = vld [vmem:[%s0 + $0x78] sm:$0xff]
    %v57 = vpack.c.bf16 %v49, %v41
    %v58 = vpack.c.bf16 %v50, %v42
    %v59 = vpack.c.bf16 %v51, %v43
    %v60 = vpack.c.bf16 %v52, %v44
    %v61 = vpack.c.bf16 %v53, %v45
    %v62 = vpack.c.bf16 %v54, %v46
    %v63 = vpack.c.bf16 %v55, %v47
    %v64 = vpack.c.bf16 %v56, %v48
    %v65 = vld [vmem:[#allocation2] sm:$0xf]
    %v66 = vld [vmem:[#allocation2 + $0x4] sm:$0xf]
    %v67 = vld [vmem:[#allocation2 + $0x8] sm:$0xf]
    %v68 = vld [vmem:[#allocation2 + $0xc] sm:$0xf]
    %v69 = vld [vmem:[#allocation2 + $0x10] sm:$0xf]
    %v70 = vld [vmem:[#allocation2 + $0x14] sm:$0xf]
    %v71 = vld [vmem:[#allocation2 + $0x18] sm:$0xf]
    %v72 = vld [vmem:[#allocation2 + $0x1c] sm:$0xf]
    %v73 = vld [vmem:[#allocation2 + $0x20] sm:$0xf]
    %v74 = vld [vmem:[#allocation2 + $0x24] sm:$0xf]
    %v75 = vld [vmem:[#allocation2 + $0x28] sm:$0xf]
    %v76 = vld [vmem:[#allocation2 + $0x2c] sm:$0xf]
    %v77 = vld [vmem:[#allocation2 + $0x30] sm:$0xf]
    %v78 = vld [vmem:[#allocation2 + $0x34] sm:$0xf]
    %v79 = vld [vmem:[#allocation2 + $0x38] sm:$0xf]
    %v80 = vld [vmem:[#allocation2 + $0x3c] sm:$0xf]
    %v81 = vld [vmem:[#allocation2 + $0x40] sm:$0xf]
    %v82 = vld [vmem:[#allocation2 + $0x44] sm:$0xf]
    %v83 = vld [vmem:[#allocation2 + $0x48] sm:$0xf]
    %v84 = vld [vmem:[#allocation2 + $0x4c] sm:$0xf]
    %v85 = vld [vmem:[#allocation2 + $0x50] sm:$0xf]
    %v86 = vld [vmem:[#allocation2 + $0x54] sm:$0xf]
    %v87 = vld [vmem:[#allocation2 + $0x58] sm:$0xf]
    %v88 = vld [vmem:[#allocation2 + $0x5c] sm:$0xf]
    %v89 = vld [vmem:[#allocation2 + $0x60] sm:$0xf]
    %v90 = vld [vmem:[#allocation2 + $0x64] sm:$0xf]
    %v91 = vld [vmem:[#allocation2 + $0x68] sm:$0xf]
    %v92 = vld [vmem:[#allocation2 + $0x6c] sm:$0xf]
    %v93 = vld [vmem:[#allocation2 + $0x70] sm:$0xf]
    %v94 = vld [vmem:[#allocation2 + $0x74] sm:$0xf]
    %v95 = vld [vmem:[#allocation2 + $0x78] sm:$0xf]
    %v96 = vld [vmem:[#allocation2 + $0x7c] sm:$0xf]
    %v97 = vld [vmem:[#allocation2 + $0x80] sm:$0xf]
    %v98 = vld [vmem:[#allocation2 + $0x84] sm:$0xf]
    %v99 = vld [vmem:[#allocation2 + $0x88] sm:$0xf]
    %v100 = vld [vmem:[#allocation2 + $0x8c] sm:$0xf]
    %v101 = vld [vmem:[#allocation2 + $0x90] sm:$0xf]
    %v102 = vld [vmem:[#allocation2 + $0x94] sm:$0xf]
    %v103 = vld [vmem:[#allocation2 + $0x98] sm:$0xf]
    %v104 = vld [vmem:[#allocation2 + $0x9c] sm:$0xf]
    %v105 = vld [vmem:[#allocation2 + $0xa0] sm:$0xf]
    %v106 = vld [vmem:[#allocation2 + $0xa4] sm:$0xf]
    %v107 = vld [vmem:[#allocation2 + $0xa8] sm:$0xf]
    %v108 = vld [vmem:[#allocation2 + $0xac] sm:$0xf]
    %v109 = vld [vmem:[#allocation2 + $0xb0] sm:$0xf]
    %v110 = vld [vmem:[#allocation2 + $0xb4] sm:$0xf]
    %v111 = vld [vmem:[#allocation2 + $0xb8] sm:$0xf]
    %v112 = vld [vmem:[#allocation2 + $0xbc] sm:$0xf]
    %v113 = vld [vmem:[#allocation2 + $0xc0] sm:$0xf]
    %v114 = vld [vmem:[#allocation2 + $0xc4] sm:$0xf]
    %v115 = vld [vmem:[#allocation2 + $0xc8] sm:$0xf]
    %v116 = vld [vmem:[#allocation2 + $0xcc] sm:$0xf]
    %v117 = vld [vmem:[#allocation2 + $0xd0] sm:$0xf]
    %v118 = vld [vmem:[#allocation2 + $0xd4] sm:$0xf]
    %v119 = vld [vmem:[#allocation2 + $0xd8] sm:$0xf]
    %v120 = vld [vmem:[#allocation2 + $0xdc] sm:$0xf]
    %v121 = vld [vmem:[#allocation2 + $0xe0] sm:$0xf]
    %v122 = vld [vmem:[#allocation2 + $0xe4] sm:$0xf]
    %v123 = vld [vmem:[#allocation2 + $0xe8] sm:$0xf]
    %v124 = vld [vmem:[#allocation2 + $0xec] sm:$0xf]
    %v125 = vld [vmem:[#allocation2 + $0xf0] sm:$0xf]
    %v126 = vld [vmem:[#allocation2 + $0xf4] sm:$0xf]
    %v127 = vld [vmem:[#allocation2 + $0xf8] sm:$0xf]
    %v128 = vld [vmem:[#allocation2 + $0xfc] sm:$0xf]
    %v129 = vld [vmem:[#allocation2 + $0x100] sm:$0xf]
    %v130 = vld [vmem:[#allocation2 + $0x104] sm:$0xf]
    %v131 = vld [vmem:[#allocation2 + $0x108] sm:$0xf]
    %v132 = vld [vmem:[#allocation2 + $0x10c] sm:$0xf]
    %v133 = vld [vmem:[#allocation2 + $0x110] sm:$0xf]
    %v134 = vld [vmem:[#allocation2 + $0x114] sm:$0xf]
    %v135 = vld [vmem:[#allocation2 + $0x118] sm:$0xf]
    %v136 = vld [vmem:[#allocation2 + $0x11c] sm:$0xf]
    %v137 = vld [vmem:[#allocation2 + $0x120] sm:$0xf]
    %v138 = vld [vmem:[#allocation2 + $0x124] sm:$0xf]
    %v139 = vld [vmem:[#allocation2 + $0x128] sm:$0xf]
    %v140 = vld [vmem:[#allocation2 + $0x12c] sm:$0xf]
    %v141 = vld [vmem:[#allocation2 + $0x130] sm:$0xf]
    %v142 = vld [vmem:[#allocation2 + $0x134] sm:$0xf]
    %v143 = vld [vmem:[#allocation2 + $0x138] sm:$0xf]
    %v144 = vld [vmem:[#allocation2 + $0x13c] sm:$0xf]
    %v145 = vld [vmem:[#allocation2 + $0x140] sm:$0xf]
    %v146 = vld [vmem:[#allocation2 + $0x144] sm:$0xf]
    %v147 = vld [vmem:[#allocation2 + $0x148] sm:$0xf]
    %v148 = vld [vmem:[#allocation2 + $0x14c] sm:$0xf]
    %v149 = vld [vmem:[#allocation2 + $0x150] sm:$0xf]
    %v150 = vld [vmem:[#allocation2 + $0x154] sm:$0xf]
    %v151 = vld [vmem:[#allocation2 + $0x158] sm:$0xf]
    %v152 = vld [vmem:[#allocation2 + $0x15c] sm:$0xf]
    %v153 = vld [vmem:[#allocation2 + $0x160] sm:$0xf]
    %v154 = vld [vmem:[#allocation2 + $0x164] sm:$0xf]
    %v155 = vld [vmem:[#allocation2 + $0x168] sm:$0xf]
    %v156 = vld [vmem:[#allocation2 + $0x16c] sm:$0xf]
    %v157 = vld [vmem:[#allocation2 + $0x170] sm:$0xf]
    %v158 = vld [vmem:[#allocation2 + $0x174] sm:$0xf]
    %v159 = vld [vmem:[#allocation2 + $0x178] sm:$0xf]
    %v160 = vld [vmem:[#allocation2 + $0x17c] sm:$0xf]
    %v161 = vld [vmem:[#allocation2 + $0x180] sm:$0xf]
    %v162 = vld [vmem:[#allocation2 + $0x184] sm:$0xf]
    %v163 = vld [vmem:[#allocation2 + $0x188] sm:$0xf]
    %v164 = vld [vmem:[#allocation2 + $0x18c] sm:$0xf]
    %v165 = vld [vmem:[#allocation2 + $0x190] sm:$0xf]
    %v166 = vld [vmem:[#allocation2 + $0x194] sm:$0xf]
    %v167 = vld [vmem:[#allocation2 + $0x198] sm:$0xf]
    %v168 = vld [vmem:[#allocation2 + $0x19c] sm:$0xf]
    %v169 = vld [vmem:[#allocation2 + $0x1a0] sm:$0xf]
    %v170 = vld [vmem:[#allocation2 + $0x1a4] sm:$0xf]
    %v171 = vld [vmem:[#allocation2 + $0x1a8] sm:$0xf]
    %v172 = vld [vmem:[#allocation2 + $0x1ac] sm:$0xf]
    %v173 = vld [vmem:[#allocation2 + $0x1b0] sm:$0xf]
    %v174 = vld [vmem:[#allocation2 + $0x1b4] sm:$0xf]
    %v175 = vld [vmem:[#allocation2 + $0x1b8] sm:$0xf]
    %v176 = vld [vmem:[#allocation2 + $0x1bc] sm:$0xf]
    %v177 = vld [vmem:[#allocation2 + $0x1c0] sm:$0xf]
    %v178 = vld [vmem:[#allocation2 + $0x1c4] sm:$0xf]
    %v179 = vld [vmem:[#allocation2 + $0x1c8] sm:$0xf]
    %v180 = vld [vmem:[#allocation2 + $0x1cc] sm:$0xf]
    %v181 = vld [vmem:[#allocation2 + $0x1d0] sm:$0xf]
    %v182 = vld [vmem:[#allocation2 + $0x1d4] sm:$0xf]
    %v183 = vld [vmem:[#allocation2 + $0x1d8] sm:$0xf]
    %v184 = vld [vmem:[#allocation2 + $0x1dc] sm:$0xf]
    %v185 = vld [vmem:[#allocation2 + $0x1e0] sm:$0xf]
    %v186 = vld [vmem:[#allocation2 + $0x1e4] sm:$0xf]
    %v187 = vld [vmem:[#allocation2 + $0x1e8] sm:$0xf]
    %v188 = vld [vmem:[#allocation2 + $0x1ec] sm:$0xf]
    %v189 = vld [vmem:[#allocation2 + $0x1f0] sm:$0xf]
    %v190 = vld [vmem:[#allocation2 + $0x1f4] sm:$0xf]
    %v191 = vld [vmem:[#allocation2 + $0x1f8] sm:$0xf]
    %v192 = vld [vmem:[#allocation2 + $0x1fc] sm:$0xf]
    %v193 = vld [vmem:[%s2] sm:$0x1]
    %v195 = vlaneseq
    %v196 = vshrl.u32 %v195, 7
    %v197 = vsub.s32 0, %v196
    %v198 = vrot.slane %v193, %v197
    %v328 = vunpack.c.l.b16 %v65
    %v329 = vunpack.c.l.b16 %v66
    %v330 = vunpack.c.l.b16 %v67
    %v331 = vunpack.c.l.b16 %v68
    %v332 = vunpack.c.l.b16 %v69
    %v333 = vunpack.c.l.b16 %v70
    %v334 = vunpack.c.l.b16 %v71
    %v335 = vunpack.c.l.b16 %v72
    %v336 = vunpack.c.l.b16 %v73
    %v337 = vunpack.c.l.b16 %v74
    %v338 = vunpack.c.l.b16 %v75
    %v339 = vunpack.c.l.b16 %v76
    %v340 = vunpack.c.l.b16 %v77
    %v341 = vunpack.c.l.b16 %v78
    %v342 = vunpack.c.l.b16 %v79
    %v343 = vunpack.c.l.b16 %v80
    %v344 = vunpack.c.l.b16 %v81
    %v345 = vunpack.c.l.b16 %v82
    %v346 = vunpack.c.l.b16 %v83
    %v347 = vunpack.c.l.b16 %v84
    %v348 = vunpack.c.l.b16 %v85
    %v349 = vunpack.c.l.b16 %v86
    %v350 = vunpack.c.l.b16 %v87
    %v351 = vunpack.c.l.b16 %v88
    %v352 = vunpack.c.l.b16 %v89
    %v353 = vunpack.c.l.b16 %v90
    %v354 = vunpack.c.l.b16 %v91
    %v355 = vunpack.c.l.b16 %v92
    %v356 = vunpack.c.l.b16 %v93
    %v357 = vunpack.c.l.b16 %v94
    %v358 = vunpack.c.l.b16 %v95
    %v359 = vunpack.c.l.b16 %v96
    %v360 = vunpack.c.l.b16 %v97
    %v361 = vunpack.c.l.b16 %v98
    %v362 = vunpack.c.l.b16 %v99
    %v363 = vunpack.c.l.b16 %v100
    %v364 = vunpack.c.l.b16 %v101
    %v365 = vunpack.c.l.b16 %v102
    %v366 = vunpack.c.l.b16 %v103
    %v367 = vunpack.c.l.b16 %v104
    %v368 = vunpack.c.l.b16 %v105
    %v369 = vunpack.c.l.b16 %v106
    %v370 = vunpack.c.l.b16 %v107
    %v371 = vunpack.c.l.b16 %v108
    %v372 = vunpack.c.l.b16 %v109
    %v373 = vunpack.c.l.b16 %v110
    %v374 = vunpack.c.l.b16 %v111
    %v375 = vunpack.c.l.b16 %v112
    %v376 = vunpack.c.l.b16 %v113
    %v377 = vunpack.c.l.b16 %v114
    %v378 = vunpack.c.l.b16 %v115
    %v379 = vunpack.c.l.b16 %v116
    %v380 = vunpack.c.l.b16 %v117
    %v381 = vunpack.c.l.b16 %v118
    %v382 = vunpack.c.l.b16 %v119
    %v383 = vunpack.c.l.b16 %v120
    %v384 = vunpack.c.l.b16 %v121
    %v385 = vunpack.c.l.b16 %v122
    %v386 = vunpack.c.l.b16 %v123
    %v387 = vunpack.c.l.b16 %v124
    %v388 = vunpack.c.l.b16 %v125
    %v389 = vunpack.c.l.b16 %v126
    %v390 = vunpack.c.l.b16 %v127
    %v391 = vunpack.c.l.b16 %v128
    %v392 = vunpack.c.l.b16 %v129
    %v393 = vunpack.c.l.b16 %v130
    %v394 = vunpack.c.l.b16 %v131
    %v395 = vunpack.c.l.b16 %v132
    %v396 = vunpack.c.l.b16 %v133
    %v397 = vunpack.c.l.b16 %v134
    %v398 = vunpack.c.l.b16 %v135
    %v399 = vunpack.c.l.b16 %v136
    %v400 = vunpack.c.l.b16 %v137
    %v401 = vunpack.c.l.b16 %v138
    %v402 = vunpack.c.l.b16 %v139
    %v403 = vunpack.c.l.b16 %v140
    %v404 = vunpack.c.l.b16 %v141
    %v405 = vunpack.c.l.b16 %v142
    %v406 = vunpack.c.l.b16 %v143
    %v407 = vunpack.c.l.b16 %v144
    %v408 = vunpack.c.l.b16 %v145
    %v409 = vunpack.c.l.b16 %v146
    %v410 = vunpack.c.l.b16 %v147
    %v411 = vunpack.c.l.b16 %v148
    %v412 = vunpack.c.l.b16 %v149
    %v413 = vunpack.c.l.b16 %v150
    %v414 = vunpack.c.l.b16 %v151
    %v415 = vunpack.c.l.b16 %v152
    %v416 = vunpack.c.l.b16 %v153
    %v417 = vunpack.c.l.b16 %v154
    %v418 = vunpack.c.l.b16 %v155
    %v419 = vunpack.c.l.b16 %v156
    %v420 = vunpack.c.l.b16 %v157
    %v421 = vunpack.c.l.b16 %v158
    %v422 = vunpack.c.l.b16 %v159
    %v423 = vunpack.c.l.b16 %v160
    %v424 = vunpack.c.l.b16 %v161
    %v425 = vunpack.c.l.b16 %v162
    %v426 = vunpack.c.l.b16 %v163
    %v427 = vunpack.c.l.b16 %v164
    %v428 = vunpack.c.l.b16 %v165
    %v429 = vunpack.c.l.b16 %v166
    %v430 = vunpack.c.l.b16 %v167
    %v431 = vunpack.c.l.b16 %v168
    %v432 = vunpack.c.l.b16 %v169
    %v433 = vunpack.c.l.b16 %v170
    %v434 = vunpack.c.l.b16 %v171
    %v435 = vunpack.c.l.b16 %v172
    %v436 = vunpack.c.l.b16 %v173
    %v437 = vunpack.c.l.b16 %v174
    %v438 = vunpack.c.l.b16 %v175
    %v439 = vunpack.c.l.b16 %v176
    %v440 = vunpack.c.l.b16 %v177
    %v441 = vunpack.c.l.b16 %v178
    %v442 = vunpack.c.l.b16 %v179
    %v443 = vunpack.c.l.b16 %v180
    %v444 = vunpack.c.l.b16 %v181
    %v445 = vunpack.c.l.b16 %v182
    %v446 = vunpack.c.l.b16 %v183
    %v447 = vunpack.c.l.b16 %v184
    %v448 = vunpack.c.l.b16 %v185
    %v449 = vunpack.c.l.b16 %v186
    %v450 = vunpack.c.l.b16 %v187
    %v451 = vunpack.c.l.b16 %v188
    %v452 = vunpack.c.l.b16 %v189
    %v453 = vunpack.c.l.b16 %v190
    %v454 = vunpack.c.l.b16 %v191
    %v455 = vunpack.c.l.b16 %v192
    %v456 = vpack.c.b16 %v329, %v328
    %v457 = vpack.c.b16 %v331, %v330
    %v458 = vpack.c.b16 %v333, %v332
    %v459 = vpack.c.b16 %v335, %v334
    %v460 = vpack.c.b16 %v337, %v336
    %v461 = vpack.c.b16 %v339, %v338
    %v462 = vpack.c.b16 %v341, %v340
    %v463 = vpack.c.b16 %v343, %v342
    %v464 = vpack.c.b16 %v345, %v344
    %v465 = vpack.c.b16 %v347, %v346
    %v466 = vpack.c.b16 %v349, %v348
    %v467 = vpack.c.b16 %v351, %v350
    %v468 = vpack.c.b16 %v353, %v352
    %v469 = vpack.c.b16 %v355, %v354
    %v470 = vpack.c.b16 %v357, %v356
    %v471 = vpack.c.b16 %v359, %v358
    %v472 = vpack.c.b16 %v361, %v360
    %v473 = vpack.c.b16 %v363, %v362
    %v474 = vpack.c.b16 %v365, %v364
    %v475 = vpack.c.b16 %v367, %v366
    %v476 = vpack.c.b16 %v369, %v368
    %v477 = vpack.c.b16 %v371, %v370
    %v478 = vpack.c.b16 %v373, %v372
    %v479 = vpack.c.b16 %v375, %v374
    %v480 = vpack.c.b16 %v377, %v376
    %v481 = vpack.c.b16 %v379, %v378
    %v482 = vpack.c.b16 %v381, %v380
    %v483 = vpack.c.b16 %v383, %v382
    %v484 = vpack.c.b16 %v385, %v384
    %v485 = vpack.c.b16 %v387, %v386
    %v486 = vpack.c.b16 %v389, %v388
    %v487 = vpack.c.b16 %v391, %v390
    %v488 = vpack.c.b16 %v393, %v392
    %v489 = vpack.c.b16 %v395, %v394
    %v490 = vpack.c.b16 %v397, %v396
    %v491 = vpack.c.b16 %v399, %v398
    %v492 = vpack.c.b16 %v401, %v400
    %v493 = vpack.c.b16 %v403, %v402
    %v494 = vpack.c.b16 %v405, %v404
    %v495 = vpack.c.b16 %v407, %v406
    %v496 = vpack.c.b16 %v409, %v408
    %v497 = vpack.c.b16 %v411, %v410
    %v498 = vpack.c.b16 %v413, %v412
    %v499 = vpack.c.b16 %v415, %v414
    %v500 = vpack.c.b16 %v417, %v416
    %v501 = vpack.c.b16 %v419, %v418
    %v502 = vpack.c.b16 %v421, %v420
    %v503 = vpack.c.b16 %v423, %v422
    %v504 = vpack.c.b16 %v425, %v424
    %v505 = vpack.c.b16 %v427, %v426
    %v506 = vpack.c.b16 %v429, %v428
    %v507 = vpack.c.b16 %v431, %v430
    %v508 = vpack.c.b16 %v433, %v432
    %v509 = vpack.c.b16 %v435, %v434
    %v510 = vpack.c.b16 %v437, %v436
    %v511 = vpack.c.b16 %v439, %v438
    %v512 = vpack.c.b16 %v441, %v440
    %v513 = vpack.c.b16 %v443, %v442
    %v514 = vpack.c.b16 %v445, %v444
    %v515 = vpack.c.b16 %v447, %v446
    %v516 = vpack.c.b16 %v449, %v448
    %v517 = vpack.c.b16 %v451, %v450
    %v518 = vpack.c.b16 %v453, %v452
    %v519 = vpack.c.b16 %v455, %v454
    %584 = vmatprep.subr.bf16.mxu0 0
    %585 = vmatpush1.bf16.msra.mxu0 %v456
    %586 = vmatprep.subr.bf16.mxu0 0
    %587 = vmatpush1.bf16.msra.mxu0 %v457
    %588 = vmatprep.subr.bf16.mxu0 0
    %589 = vmatpush1.bf16.msra.mxu0 %v458
    %590 = vmatprep.subr.bf16.mxu0 0
    %591 = vmatpush1.bf16.msra.mxu0 %v459
    %592 = vmatprep.subr.bf16.mxu0 0
    %593 = vmatpush1.bf16.msra.mxu0 %v460
    %594 = vmatprep.subr.bf16.mxu0 0
    %595 = vmatpush1.bf16.msra.mxu0 %v461
    %596 = vmatprep.subr.bf16.mxu0 0
    %597 = vmatpush1.bf16.msra.mxu0 %v462
    %598 = vmatprep.subr.bf16.mxu0 0
    %599 = vmatpush1.bf16.msra.mxu0 %v463
    %600 = vmatprep.subr.bf16.mxu0 0
    %601 = vmatpush1.bf16.msra.mxu0 %v464
    %602 = vmatprep.subr.bf16.mxu0 0
    %603 = vmatpush1.bf16.msra.mxu0 %v465
    %604 = vmatprep.subr.bf16.mxu0 0
    %605 = vmatpush1.bf16.msra.mxu0 %v466
    %606 = vmatprep.subr.bf16.mxu0 0
    %607 = vmatpush1.bf16.msra.mxu0 %v467
    %608 = vmatprep.subr.bf16.mxu0 0
    %609 = vmatpush1.bf16.msra.mxu0 %v468
    %610 = vmatprep.subr.bf16.mxu0 0
    %611 = vmatpush1.bf16.msra.mxu0 %v469
    %612 = vmatprep.subr.bf16.mxu0 0
    %613 = vmatpush1.bf16.msra.mxu0 %v470
    %614 = vmatprep.subr.bf16.mxu0 0
    %615 = vmatpush1.bf16.msra.mxu0 %v471
    %616 = vmatprep.mubr.bf16.mxu0 %v58
    %617 = vmatmul.mubr.bf16.gmra.mrb[0].mxu0 %v57
    %v618 = vpop.f32.mrb[0].mxu0
    %v619 = vadd.f32 %v198, %v618
    %v620 = vpop.f32.mrb[0].mxu0
    %v621 = vpop.f32.mrb[0].mxu0
    %v622 = vadd.f32 %v198, %v621
    %v623 = vpop.f32.mrb[0].mxu0
    %624 = vdwg.mxu0
    %625 = vmatprep.subr.bf16.mxu0 0
    %626 = vmatpush1.bf16.msra.mxu0 %v472
    %627 = vmatprep.subr.bf16.mxu0 0
    %628 = vmatpush1.bf16.msra.mxu0 %v473
    %629 = vmatprep.subr.bf16.mxu0 0
    %630 = vmatpush1.bf16.msra.mxu0 %v474
    %631 = vmatprep.subr.bf16.mxu0 0
    %632 = vmatpush1.bf16.msra.mxu0 %v475
    %633 = vmatprep.subr.bf16.mxu0 0
    %634 = vmatpush1.bf16.msra.mxu0 %v476
    %635 = vmatprep.subr.bf16.mxu0 0
    %636 = vmatpush1.bf16.msra.mxu0 %v477
    %637 = vmatprep.subr.bf16.mxu0 0
    %638 = vmatpush1.bf16.msra.mxu0 %v478
    %639 = vmatprep.subr.bf16.mxu0 0
    %640 = vmatpush1.bf16.msra.mxu0 %v479
    %641 = vmatprep.subr.bf16.mxu0 0
    %642 = vmatpush1.bf16.msra.mxu0 %v480
    %643 = vmatprep.subr.bf16.mxu0 0
    %644 = vmatpush1.bf16.msra.mxu0 %v481
    %645 = vmatprep.subr.bf16.mxu0 0
    %646 = vmatpush1.bf16.msra.mxu0 %v482
    %647 = vmatprep.subr.bf16.mxu0 0
    %648 = vmatpush1.bf16.msra.mxu0 %v483
    %649 = vmatprep.subr.bf16.mxu0 0
    %650 = vmatpush1.bf16.msra.mxu0 %v484
    %651 = vmatprep.subr.bf16.mxu0 0
    %652 = vmatpush1.bf16.msra.mxu0 %v485
    %653 = vmatprep.subr.bf16.mxu0 0
    %654 = vmatpush1.bf16.msra.mxu0 %v486
    %655 = vmatprep.subr.bf16.mxu0 0
    %656 = vmatpush1.bf16.msra.mxu0 %v487
    %657 = vmatprep.mubr.bf16.mxu0 %v60
    %658 = vmatmul.mubr.bf16.gmra.mrb[0].mxu0 %v59
    %v659 = vpop.f32.mrb[0].mxu0
    %v660 = vadd.f32 %v619, %v659
    %v661 = vpop.f32.mrb[0].mxu0
    %v662 = vpop.f32.mrb[0].mxu0
    %v663 = vadd.f32 %v622, %v662
    %v664 = vpop.f32.mrb[0].mxu0
    %665 = vdwg.mxu0
    %666 = vmatprep.subr.bf16.mxu0 0
    %667 = vmatpush1.bf16.msra.mxu0 %v488
    %668 = vmatprep.subr.bf16.mxu0 0
    %669 = vmatpush1.bf16.msra.mxu0 %v489
    %670 = vmatprep.subr.bf16.mxu0 0
    %671 = vmatpush1.bf16.msra.mxu0 %v490
    %672 = vmatprep.subr.bf16.mxu0 0
    %673 = vmatpush1.bf16.msra.mxu0 %v491
    %674 = vmatprep.subr.bf16.mxu0 0
    %675 = vmatpush1.bf16.msra.mxu0 %v492
    %676 = vmatprep.subr.bf16.mxu0 0
    %677 = vmatpush1.bf16.msra.mxu0 %v493
    %678 = vmatprep.subr.bf16.mxu0 0
    %679 = vmatpush1.bf16.msra.mxu0 %v494
    %680 = vmatprep.subr.bf16.mxu0 0
    %681 = vmatpush1.bf16.msra.mxu0 %v495
    %682 = vmatprep.subr.bf16.mxu0 0
    %683 = vmatpush1.bf16.msra.mxu0 %v496
    %684 = vmatprep.subr.bf16.mxu0 0
    %685 = vmatpush1.bf16.msra.mxu0 %v497
    %686 = vmatprep.subr.bf16.mxu0 0
    %687 = vmatpush1.bf16.msra.mxu0 %v498
    %688 = vmatprep.subr.bf16.mxu0 0
    %689 = vmatpush1.bf16.msra.mxu0 %v499
    %690 = vmatprep.subr.bf16.mxu0 0
    %691 = vmatpush1.bf16.msra.mxu0 %v500
    %692 = vmatprep.subr.bf16.mxu0 0
    %693 = vmatpush1.bf16.msra.mxu0 %v501
    %694 = vmatprep.subr.bf16.mxu0 0
    %695 = vmatpush1.bf16.msra.mxu0 %v502
    %696 = vmatprep.subr.bf16.mxu0 0
    %697 = vmatpush1.bf16.msra.mxu0 %v503
    %698 = vmatprep.mubr.bf16.mxu0 %v62
    %699 = vmatmul.mubr.bf16.gmra.mrb[0].mxu0 %v61
    %v700 = vpop.f32.mrb[0].mxu0
    %v701 = vadd.f32 %v660, %v700
    %v702 = vpop.f32.mrb[0].mxu0
    %v703 = vpop.f32.mrb[0].mxu0
    %v704 = vadd.f32 %v663, %v703
    %v705 = vpop.f32.mrb[0].mxu0
    %706 = vdwg.mxu0
    %707 = vmatprep.subr.bf16.mxu0 0
    %708 = vmatpush1.bf16.msra.mxu0 %v504
    %709 = vmatprep.subr.bf16.mxu0 0
    %710 = vmatpush1.bf16.msra.mxu0 %v505
    %711 = vmatprep.subr.bf16.mxu0 0
    %712 = vmatpush1.bf16.msra.mxu0 %v506
    %713 = vmatprep.subr.bf16.mxu0 0
    %714 = vmatpush1.bf16.msra.mxu0 %v507
    %715 = vmatprep.subr.bf16.mxu0 0
    %716 = vmatpush1.bf16.msra.mxu0 %v508
    %717 = vmatprep.subr.bf16.mxu0 0
    %718 = vmatpush1.bf16.msra.mxu0 %v509
    %719 = vmatprep.subr.bf16.mxu0 0
    %720 = vmatpush1.bf16.msra.mxu0 %v510
    %721 = vmatprep.subr.bf16.mxu0 0
    %722 = vmatpush1.bf16.msra.mxu0 %v511
    %723 = vmatprep.subr.bf16.mxu0 0
    %724 = vmatpush1.bf16.msra.mxu0 %v512
    %725 = vmatprep.subr.bf16.mxu0 0
    %726 = vmatpush1.bf16.msra.mxu0 %v513
    %727 = vmatprep.subr.bf16.mxu0 0
    %728 = vmatpush1.bf16.msra.mxu0 %v514
    %729 = vmatprep.subr.bf16.mxu0 0
    %730 = vmatpush1.bf16.msra.mxu0 %v515
    %731 = vmatprep.subr.bf16.mxu0 0
    %732 = vmatpush1.bf16.msra.mxu0 %v516
    %733 = vmatprep.subr.bf16.mxu0 0
    %734 = vmatpush1.bf16.msra.mxu0 %v517
    %735 = vmatprep.subr.bf16.mxu0 0
    %736 = vmatpush1.bf16.msra.mxu0 %v518
    %737 = vmatprep.subr.bf16.mxu0 0
    %738 = vmatpush1.bf16.msra.mxu0 %v519
    %739 = vmatprep.mubr.bf16.mxu0 %v64
    %740 = vmatmul.mubr.bf16.gmra.mrb[0].mxu0 %v63
    %v741 = vpop.f32.mrb[0].mxu0
    %v742 = vadd.f32 %v701, %v741
    %v743 = vpop.f32.mrb[0].mxu0
    %v744 = vpop.f32.mrb[0].mxu0
    %v745 = vadd.f32 %v704, %v744
    %v746 = vpop.f32.mrb[0].mxu0
    %747 = vdwg.mxu0
    %v748 = vmax.f32 %v742, 0.0
    %v749 = vmax.f32 %v745, 0.0
    %v750 = vpack.c.bf16 %v749, %v748
    %v751 = vld [vmem:[%s3] sm:$0xf]
    %v752 = vld [vmem:[%s3 + $0x4] sm:$0xf]
    %v753 = vld [vmem:[%s3 + $0x8] sm:$0xf]
    %v754 = vld [vmem:[%s3 + $0xc] sm:$0xf]
    %v755 = vld [vmem:[%s3 + $0x10] sm:$0xf]
    %v756 = vld [vmem:[%s3 + $0x14] sm:$0xf]
    %v757 = vld [vmem:[%s3 + $0x18] sm:$0xf]
    %v758 = vld [vmem:[%s3 + $0x1c] sm:$0xf]
    %v759 = vld [vmem:[%s3 + $0x20] sm:$0xf]
    %v760 = vld [vmem:[%s3 + $0x24] sm:$0xf]
    %v761 = vld [vmem:[%s3 + $0x28] sm:$0xf]
    %v762 = vld [vmem:[%s3 + $0x2c] sm:$0xf]
    %v763 = vld [vmem:[%s3 + $0x30] sm:$0xf]
    %v764 = vld [vmem:[%s3 + $0x34] sm:$0xf]
    %v765 = vld [vmem:[%s3 + $0x38] sm:$0xf]
    %v766 = vld [vmem:[%s3 + $0x3c] sm:$0xf]
    %v767 = vld [vmem:[%s4] sm:$0x1]
    %v769 = vlaneseq
    %v770 = vshrl.u32 %v769, 7
    %v771 = vsub.s32 0, %v770
    %v772 = vrot.slane %v767, %v771
    %v790 = vunpack.c.l.b16 %v751
    %v791 = vunpack.c.l.b16 %v752
    %v792 = vunpack.c.l.b16 %v753
    %v793 = vunpack.c.l.b16 %v754
    %v794 = vunpack.c.l.b16 %v755
    %v795 = vunpack.c.l.b16 %v756
    %v796 = vunpack.c.l.b16 %v757
    %v797 = vunpack.c.l.b16 %v758
    %v798 = vunpack.c.l.b16 %v759
    %v799 = vunpack.c.l.b16 %v760
    %v800 = vunpack.c.l.b16 %v761
    %v801 = vunpack.c.l.b16 %v762
    %v802 = vunpack.c.l.b16 %v763
    %v803 = vunpack.c.l.b16 %v764
    %v804 = vunpack.c.l.b16 %v765
    %v805 = vunpack.c.l.b16 %v766
    %v806 = vpack.c.b16 %v791, %v790
    %v807 = vpack.c.b16 %v793, %v792
    %v808 = vpack.c.b16 %v795, %v794
    %v809 = vpack.c.b16 %v797, %v796
    %v810 = vpack.c.b16 %v799, %v798
    %v811 = vpack.c.b16 %v801, %v800
    %v812 = vpack.c.b16 %v803, %v802
    %v813 = vpack.c.b16 %v805, %v804
    %822 = vmatprep.subr.bf16.mxu0 0
    %823 = vmatpush1.bf16.msra.mxu0 %v806
    %824 = vmatprep.subr.bf16.mxu0 0
    %825 = vmatpush1.bf16.msra.mxu0 %v807
    %826 = vmatprep.subr.bf16.mxu0 0
    %827 = vmatpush1.bf16.msra.mxu0 %v808
    %828 = vmatprep.subr.bf16.mxu0 0
    %829 = vmatpush1.bf16.msra.mxu0 %v809
    %830 = vmatprep.subr.bf16.mxu0 0
    %831 = vmatpush1.bf16.msra.mxu0 %v810
    %832 = vmatprep.subr.bf16.mxu0 0
    %833 = vmatpush1.bf16.msra.mxu0 %v811
    %834 = vmatprep.subr.bf16.mxu0 0
    %835 = vmatpush1.bf16.msra.mxu0 %v812
    %836 = vmatprep.subr.bf16.mxu0 0
    %837 = vmatpush1.bf16.msra.mxu0 %v813
    %838 = vmatprep.subr.bf16.mxu0 0
    %839 = vmatpush1.bf16.msra.mxu0 0
    %840 = vmatprep.subr.bf16.mxu0 0
    %841 = vmatpush1.bf16.msra.mxu0 0
    %842 = vmatprep.subr.bf16.mxu0 0
    %843 = vmatpush1.bf16.msra.mxu0 0
    %844 = vmatprep.subr.bf16.mxu0 0
    %845 = vmatpush1.bf16.msra.mxu0 0
    %846 = vmatprep.subr.bf16.mxu0 0
    %847 = vmatpush1.bf16.msra.mxu0 0
    %848 = vmatprep.subr.bf16.mxu0 0
    %849 = vmatpush1.bf16.msra.mxu0 0
    %850 = vmatprep.subr.bf16.mxu0 0
    %851 = vmatpush1.bf16.msra.mxu0 0
    %852 = vmatprep.subr.bf16.mxu0 0
    %853 = vmatpush1.bf16.msra.mxu0 0
    %854 = vmatprep.mubr.bf16.mxu0 0
    %855 = vmatmul.mubr.bf16.gmra.mrb[0].mxu0 %v750
    %v856 = vpop.f32.mrb[0].mxu0
    %v857 = vadd.f32 %v772, %v856
    %v858 = vpop.f32.mrb[0].mxu0
    %v859 = vpop.f32.mrb[0].mxu0
    %v860 = vadd.f32 %v772, %v859
    %v861 = vpop.f32.mrb[0].mxu0
    %862 = vdwg.mxu0
    %v863 = vmax.f32 %v857, 0.0
    %v864 = vmax.f32 %v860, 0.0
    %v865 = vpack.c.bf16 %v864, %v863
    %v866 = vld [vmem:[%s5] sm:$0xf]
    %v867 = vld [vmem:[%s5 + $0x4] sm:$0xf]
    %v868 = vld [vmem:[%s5 + $0x8] sm:$0xf]
    %v869 = vld [vmem:[%s5 + $0xc] sm:$0xf]
    %v870 = vld [vmem:[%s5 + $0x10] sm:$0xf]
    %v871 = vld [vmem:[%s5 + $0x14] sm:$0xf]
    %v872 = vld [vmem:[%s5 + $0x18] sm:$0xf]
    %v873 = vld [vmem:[%s5 + $0x1c] sm:$0xf]
    %v874 = vld [vmem:[%s5 + $0x20] sm:$0xf]
    %v875 = vld [vmem:[%s5 + $0x24] sm:$0xf]
    %v876 = vld [vmem:[%s5 + $0x28] sm:$0xf]
    %v877 = vld [vmem:[%s5 + $0x2c] sm:$0xf]
    %v878 = vld [vmem:[%s5 + $0x30] sm:$0xf]
    %v879 = vld [vmem:[%s5 + $0x34] sm:$0xf]
    %v880 = vld [vmem:[%s5 + $0x38] sm:$0xf]
    %v881 = vld [vmem:[%s5 + $0x3c] sm:$0xf]
    %v882 = vld [vmem:[%s6] sm:$0x1]
    %v884 = vlaneseq
    %v885 = vshrl.u32 %v884, 7
    %v886 = vsub.s32 0, %v885
    %v887 = vrot.slane %v882, %v886
    %v905 = vunpack.c.l.b16 %v866
    %v906 = vunpack.c.l.b16 %v867
    %v907 = vunpack.c.l.b16 %v868
    %v908 = vunpack.c.l.b16 %v869
    %v909 = vunpack.c.l.b16 %v870
    %v910 = vunpack.c.l.b16 %v871
    %v911 = vunpack.c.l.b16 %v872
    %v912 = vunpack.c.l.b16 %v873
    %v913 = vunpack.c.l.b16 %v874
    %v914 = vunpack.c.l.b16 %v875
    %v915 = vunpack.c.l.b16 %v876
    %v916 = vunpack.c.l.b16 %v877
    %v917 = vunpack.c.l.b16 %v878
    %v918 = vunpack.c.l.b16 %v879
    %v919 = vunpack.c.l.b16 %v880
    %v920 = vunpack.c.l.b16 %v881
    %v921 = vpack.c.b16 %v906, %v905
    %v922 = vpack.c.b16 %v908, %v907
    %v923 = vpack.c.b16 %v910, %v909
    %v924 = vpack.c.b16 %v912, %v911
    %v925 = vpack.c.b16 %v914, %v913
    %v926 = vpack.c.b16 %v916, %v915
    %v927 = vpack.c.b16 %v918, %v917
    %v928 = vpack.c.b16 %v920, %v919
    %937 = vmatprep.subr.bf16.mxu0 0
    %938 = vmatpush1.bf16.msra.mxu0 %v921
    %939 = vmatprep.subr.bf16.mxu0 0
    %940 = vmatpush1.bf16.msra.mxu0 %v922
    %941 = vmatprep.subr.bf16.mxu0 0
    %942 = vmatpush1.bf16.msra.mxu0 %v923
    %943 = vmatprep.subr.bf16.mxu0 0
    %944 = vmatpush1.bf16.msra.mxu0 %v924
    %945 = vmatprep.subr.bf16.mxu0 0
    %946 = vmatpush1.bf16.msra.mxu0 %v925
    %947 = vmatprep.subr.bf16.mxu0 0
    %948 = vmatpush1.bf16.msra.mxu0 %v926
    %949 = vmatprep.subr.bf16.mxu0 0
    %950 = vmatpush1.bf16.msra.mxu0 %v927
    %951 = vmatprep.subr.bf16.mxu0 0
    %952 = vmatpush1.bf16.msra.mxu0 %v928
    %953 = vmatprep.subr.bf16.mxu0 0
    %954 = vmatpush1.bf16.msra.mxu0 0
    %955 = vmatprep.subr.bf16.mxu0 0
    %956 = vmatpush1.bf16.msra.mxu0 0
    %957 = vmatprep.subr.bf16.mxu0 0
    %958 = vmatpush1.bf16.msra.mxu0 0
    %959 = vmatprep.subr.bf16.mxu0 0
    %960 = vmatpush1.bf16.msra.mxu0 0
    %961 = vmatprep.subr.bf16.mxu0 0
    %962 = vmatpush1.bf16.msra.mxu0 0
    %963 = vmatprep.subr.bf16.mxu0 0
    %964 = vmatpush1.bf16.msra.mxu0 0
    %965 = vmatprep.subr.bf16.mxu0 0
    %966 = vmatpush1.bf16.msra.mxu0 0
    %967 = vmatprep.subr.bf16.mxu0 0
    %968 = vmatpush1.bf16.msra.mxu0 0
    %969 = vmatprep.mubr.bf16.mxu0 0
    %970 = vmatmul.mubr.bf16.gmra.mrb[0].mxu0 %v865
    %v971 = vpop.f32.mrb[0].mxu0
    %v972 = vadd.f32 %v887, %v971
    %v973 = vpop.f32.mrb[0].mxu0
    %v974 = vpop.f32.mrb[0].mxu0
    %v975 = vadd.f32 %v887, %v974
    %v976 = vpop.f32.mrb[0].mxu0
    %977 = vdwg.mxu0
    %978 = vst [vmem:[%s7] sm:$0xff] %v972
    %979 = vst [vmem:[%s7 + $0x8] sm:$0xff] %v975
    // Predicated region
    $region34: #{mlp_forward.1} parent=1 // pred_check
      _
    $region35: #{mlp_forward.1} parent=1 // pred_check_branch
      %981 = sbr.rel (0) target = $region37
    $region36: #{mlp_forward.1} parent=1 // pred_region
      _
    $region37: #{mlp_forward.1} parent=1 // pred_fallthru
      _
    // Predicated region
    $region38: #{mlp_forward.1} parent=1 // pred_check
      _
    $region39: #{mlp_forward.1} parent=1 // pred_check_branch
      %983 = sbr.rel (0) target = $region41
    $region40: #{mlp_forward.1} parent=1 // pred_region
      _
    $region41: #{mlp_forward.1} parent=1 // pred_fallthru
      _
    %984 = vsyncpa [#allocation3], 1

</llo_original>
